<compile_context>
chip_gen: v7x
topology: tpu7x:2x2x1
jax: 0.10.0
libtpu: 0.0.40
codegen_flags: <defaults>
</compile_context>

<pallas_src>
import functools

import jax
import jax.numpy as jnp
from jax.experimental import pallas as pl
from jax.experimental.pallas import tpu as pltpu

# ---- "const" values implied by the PyTorch module (synthetic, small) ----
DIMS_ST = 4          # const.dims_st        (e.g. x, y, z, t)
DIMS_MHD_STATE = 8   # const.dims_mhd_state (MHD state vector size)


def _transformer_kernel(n_layers, L, half, compute_dtype,
                        zt_ref,            # [DIMS_ST, TB]      compute_dtype
                        w_uvh_ref,         # [3L, DIMS_ST]      compute_dtype (fused U/V/H)
                        b_uvh_ref,         # [3L, 1]            f32
                        wz_ref,            # [n_layers, L, L]   compute_dtype (beta folded in)
                        bz_ref,            # [n_layers, L, 1]   f32            (beta folded in)
                        wf_ref,            # [DIMS_MHD, L]      compute_dtype
                        bf_ref,            # [DIMS_MHD, 1]      f32
                        out_ref):          # [DIMS_MHD, TB]     f32
    w_uvh = w_uvh_ref[...]
    b_uvh = b_uvh_ref[...]
    zt = zt_ref[...]

    def project(zc):
        # One fused MXU matmul for U, V and H_0 (K=4, N=3L) instead of three.
        uvh = jnp.dot(w_uvh, zc, preferred_element_type=jnp.float32) + b_uvh
        u = uvh[0 * L:1 * L, :]
        v = uvh[1 * L:2 * L, :]
        h = uvh[2 * L:3 * L, :]
        return u, v - u, h          # hoisted: h = (1-s)*u + s*v  ==  u + s*d

    # Two independent half-tiles -> EUP/VPU work of one half overlaps MXU of the other.
    u0, d0, h0 = project(zt[:, :half])
    u1, d1, h1 = project(zt[:, half:])

    # Small static number of Z-layers -> unrolled Python loop (static indices).
    for k in range(n_layers):
        wk = wz_ref[k]              # beta already folded into wk / bk
        bk = bz_ref[k]
        s0 = jnp.dot(wk, h0.astype(compute_dtype),
                     preferred_element_type=jnp.float32) + bk
        s1 = jnp.dot(wk, h1.astype(compute_dtype),
                     preferred_element_type=jnp.float32) + bk
        s0 = jnp.tanh(s0)           # act_func='tanh' (module default), f32 on EUP
        s1 = jnp.tanh(s1)
        h0 = u0 + s0 * d0
        h1 = u1 + s1 * d1

    wf = wf_ref[...]
    bf = bf_ref[...]
    out_ref[:, :half] = (jnp.dot(wf, h0.astype(compute_dtype),
                                 preferred_element_type=jnp.float32)
                         + bf).astype(out_ref.dtype)
    out_ref[:, half:] = (jnp.dot(wf, h1.astype(compute_dtype),
                                 preferred_element_type=jnp.float32)
                         + bf).astype(out_ref.dtype)


def transformer_forward(kparams, z, *, tb=4096):
    """Batch-tiled Pallas forward pass.

    kparams: output of `prep_kernel_params`.
    z: [batch, DIMS_ST] float32.  Returns [batch, DIMS_MHD_STATE] float32.
    `tb` is the batch tile size (lane axis); must be a multiple of 256 (two
    128-lane half-tiles).  Pick tb so that n_tiles >= 2 per chip (v7x megacore).
    """
    assert tb % 256 == 0, "batch tile must split into two 128-lane-aligned halves"
    n_layers, L, _ = kparams["wz"].shape
    compute_dtype = kparams["wz"].dtype
    B = z.shape[0]
    n_tiles = pl.cdiv(B, tb)
    B_pad = n_tiles * tb

    # Lane-dense layout: pad batch to the tile size, batch on the last (lane) axis.
    # NOTE: for production callers that already hold z as [DIMS_ST, B] (and can
    # consume a [DIMS_MHD, B] output), skip these skinny-array transposes.
    zt = jnp.pad(z.astype(jnp.float32), ((0, B_pad - B), (0, 0))).T.astype(compute_dtype)

    kernel = functools.partial(_transformer_kernel, n_layers, L, tb // 2, compute_dtype)

    grid_spec = pltpu.PrefetchScalarGridSpec(
        num_scalar_prefetch=0,
        grid=(n_tiles,),
        in_specs=[
            # Input tile: streamed / double-buffered over the batch grid.
            pl.BlockSpec((DIMS_ST, tb), lambda i: (0, i)),
            # Weights & biases: constant block index -> stay VMEM-resident.
            pl.BlockSpec((3 * L, DIMS_ST), lambda i: (0, 0)),
            pl.BlockSpec((3 * L, 1), lambda i: (0, 0)),
            pl.BlockSpec((n_layers, L, L), lambda i: (0, 0, 0)),
            pl.BlockSpec((n_layers, L, 1), lambda i: (0, 0, 0)),
            pl.BlockSpec((DIMS_MHD_STATE, L), lambda i: (0, 0)),
            pl.BlockSpec((DIMS_MHD_STATE, 1), lambda i: (0, 0)),
        ],
        out_specs=pl.BlockSpec((DIMS_MHD_STATE, tb), lambda i: (0, i)),
    )

    out_t = pl.pallas_call(
        kernel,
        out_shape=jax.ShapeDtypeStruct((DIMS_MHD_STATE, B_pad), jnp.float32),
        grid_spec=grid_spec,
        compiler_params=pltpu.CompilerParams(
            dimension_semantics=("parallel",),          # shards batch tiles on v7x's 2 TCs
            vmem_limit_bytes=32 * 1024 * 1024,          # explicit (v5e scoped default is 16 MiB)
        ),
    )(zt,
      kparams["w_uvh"], kparams["b_uvh"],
      kparams["wz"], kparams["bz"],
      kparams["wf"], kparams["bf"])

    return out_t[:, :B].T


def init_params(key, n_layers, layer_size):
    """Deterministic synthetic parameters matching the nn.Module's __init__.

    Weights are kept in PyTorch's [out_features, in_features] layout; biases 1-D.
    """
    keys = jax.random.split(key, 11)

    def lin(kw, kb, fan_in, fan_out):
        # torch.nn.Linear default init: U(-1/sqrt(fan_in), 1/sqrt(fan_in))
        bound = 1.0 / jnp.sqrt(jnp.float32(fan_in))
        w = jax.random.uniform(kw, (fan_out, fan_in), jnp.float32, -bound, bound)
        b = jax.random.uniform(kb, (fan_out,), jnp.float32, -bound, bound)
        return w, b

    wu, bu = lin(keys[0], keys[1], DIMS_ST, layer_size)
    wv, bv = lin(keys[2], keys[3], DIMS_ST, layer_size)
    wh, bh = lin(keys[4], keys[5], DIMS_ST, layer_size)
    wf, bf = lin(keys[6], keys[7], layer_size, DIMS_MHD_STATE)

    bound = 1.0 / jnp.sqrt(jnp.float32(layer_size))
    wz = jax.random.uniform(keys[8], (n_layers, layer_size, layer_size),
                            jnp.float32, -bound, bound)
    bz = jax.random.uniform(keys[9], (n_layers, layer_size),
                            jnp.float32, -bound, bound)

    beta = jax.random.normal(keys[10], (1,), jnp.float32)   # nn.Parameter(torch.randn(1))

    return dict(beta=beta, wu=wu, bu=bu, wv=wv, bv=bv, wh=wh, bh=bh,
                wz=wz, bz=bz, wf=wf, bf=bf)


def prep_kernel_params(params, compute_dtype=jnp.bfloat16):
    """One-time prep: fuse U/V/H, fold beta into Z layers, cast MXU operands.

    Biases stay f32 and column-shaped ([*, 1]) so they broadcast over lanes.
    Set compute_dtype=jnp.float32 for strict f32 matmul semantics.
    """
    beta = params["beta"][0]
    w_uvh = jnp.concatenate([params["wu"], params["wv"], params["wh"]], axis=0)
    b_uvh = jnp.concatenate([params["bu"], params["bv"], params["bh"]], axis=0)
    return dict(
        w_uvh=w_uvh.astype(compute_dtype),                      # [3L, DIMS_ST]
        b_uvh=b_uvh[:, None].astype(jnp.float32),                # [3L, 1]
        wz=(beta * params["wz"]).astype(compute_dtype),          # [n_layers, L, L]
        bz=(beta * params["bz"])[..., None].astype(jnp.float32), # [n_layers, L, 1]
        wf=params["wf"].astype(compute_dtype),                   # [DIMS_MHD, L]
        bf=params["bf"][:, None].astype(jnp.float32),            # [DIMS_MHD, 1]
    )


def reference_forward(params, z):
    """Pure-JAX f32 reference mirroring the PyTorch forward exactly."""
    beta = params["beta"][0]
    u = z @ params["wu"].T + params["bu"]
    v = z @ params["wv"].T + params["bv"]
    h = z @ params["wh"].T + params["bh"]
    for k in range(params["wz"].shape[0]):
        s = jnp.tanh(beta * (h @ params["wz"][k].T + params["bz"][k]))
        h = (1.0 - s) * u + s * v
    return h @ params["wf"].T + params["bf"]


def kernel_math_reference(kparams, z):
    """Pure-JAX replica of the kernel's arithmetic (same bf16 casts / rewrites)."""
    cd = kparams["wz"].dtype
    L = kparams["wz"].shape[1]
    zt = z.T.astype(cd)                                          # [DIMS_ST, B]
    uvh = jnp.dot(kparams["w_uvh"], zt,
                  preferred_element_type=jnp.float32) + kparams["b_uvh"]
    u, v, h = uvh[:L], uvh[L:2 * L], uvh[2 * L:]
    d = v - u
    for k in range(kparams["wz"].shape[0]):
        s = jnp.tanh(jnp.dot(kparams["wz"][k], h.astype(cd),
                             preferred_element_type=jnp.float32) + kparams["bz"][k])
        h = u + s * d
    out = jnp.dot(kparams["wf"], h.astype(cd),
                  preferred_element_type=jnp.float32) + kparams["bf"]
    return out.T


if __name__ == "__main__":
    n_layers = 3
    layer_size = 32
    batch = 300        # deliberately not a multiple of the tile -> exercises padding
    tb = 256           # small tile for this smoke test (2 batch tiles); use 2048-8192 in prod

    key = jax.random.PRNGKey(0)
    k_params, k_input = jax.random.split(key)
    params = init_params(k_params, n_layers, layer_size)
    kparams = prep_kernel_params(params, compute_dtype=jnp.bfloat16)
    z = jax.random.normal(k_input, (batch, DIMS_ST), jnp.float32)

    out = transformer_forward(kparams, z, tb=tb)
    out = jax.block_until_ready(out)
    assert out.shape == (batch, DIMS_MHD_STATE)

    # Tight check vs. a pure-JAX replica of the kernel arithmetic (same bf16 rounding).
    ref_kernel_math = kernel_math_reference(kparams, z)
    assert jnp.allclose(out, ref_kernel_math, atol=1e-3, rtol=1e-3), \
        "kernel mismatch vs bf16 reference"

    # Loose sanity check vs. the full-f32 PyTorch-semantics forward
    # (difference is the intentional bf16 quantization of the MXU operands).
    ref_f32 = reference_forward(params, z)
    assert jnp.allclose(out, ref_f32, atol=2e-1, rtol=2e-1), \
        "kernel diverged from f32 module semantics"

    print("KERNEL_OK")
</pallas_src>

<mosaic_0001>
module attributes {stable_mosaic.version = 11 : i64} {
  func.func @_transformer_kernel(%arg0: i32, %arg1: memref<4x256xbf16, #tpu.memory_space<vmem>>, %arg2: memref<96x4xbf16, #tpu.memory_space<vmem>>, %arg3: memref<96x1xf32, #tpu.memory_space<vmem>>, %arg4: memref<3x32x32xbf16, #tpu.memory_space<vmem>>, %arg5: memref<3x32x1xf32, #tpu.memory_space<vmem>>, %arg6: memref<8x32xbf16, #tpu.memory_space<vmem>>, %arg7: memref<8x1xf32, #tpu.memory_space<vmem>>, %arg8: memref<8x256xf32, #tpu.memory_space<vmem>>) attributes {dimension_semantics = [#tpu.dimension_semantics<parallel>], iteration_bounds = array<i64: 2>, scalar_prefetch = 0 : i64, scratch_operands = 0 : i64, tpu.core_type = #tpu.core_type<tc>, window_params = [{transform_indices = @transform_0, window_bounds = array<i64: 4, 256>}, {pipeline_mode = #tpu.pipeline_mode<synchronous>, transform_indices = @transform_1, window_bounds = array<i64: 96, 4>}, {pipeline_mode = #tpu.pipeline_mode<synchronous>, transform_indices = @transform_2, window_bounds = array<i64: 96, 1>}, {pipeline_mode = #tpu.pipeline_mode<synchronous>, transform_indices = @transform_3, window_bounds = array<i64: 3, 32, 32>}, {pipeline_mode = #tpu.pipeline_mode<synchronous>, transform_indices = @transform_4, window_bounds = array<i64: 3, 32, 1>}, {pipeline_mode = #tpu.pipeline_mode<synchronous>, transform_indices = @transform_5, window_bounds = array<i64: 8, 32>}, {pipeline_mode = #tpu.pipeline_mode<synchronous>, transform_indices = @transform_6, window_bounds = array<i64: 8, 1>}, {transform_indices = @transform_7, window_bounds = array<i64: 8, 256>}]} {
    %c0 = arith.constant 0 : index
    %c0_0 = arith.constant 0 : index
    %0 = vector.load %arg2[%c0, %c0_0] : memref<96x4xbf16, #tpu.memory_space<vmem>>, vector<96x4xbf16>
    %c0_1 = arith.constant 0 : index
    %c0_2 = arith.constant 0 : index
    %1 = vector.load %arg3[%c0_1, %c0_2] : memref<96x1xf32, #tpu.memory_space<vmem>>, vector<96x1xf32>
    %c0_3 = arith.constant 0 : index
    %c0_4 = arith.constant 0 : index
    %2 = vector.load %arg1[%c0_3, %c0_4] : memref<4x256xbf16, #tpu.memory_space<vmem>>, vector<4x256xbf16>
    %3 = vector.extract_strided_slice %2 {offsets = [0, 0], sizes = [4, 128], strides = [1, 1]} : vector<4x256xbf16> to vector<4x128xbf16>
    %cst = arith.constant dense<0.000000e+00> : vector<96x128xf32>
    %4 = tpu.matmul %0, %3, %cst {dimension_numbers = #tpu.dot_dimension_numbers<[1], [0], [0], [1], [0, 0, 1, 1], [], []>} : vector<96x4xbf16>, vector<4x128xbf16>, vector<96x128xf32> -> vector<96x128xf32>
    %5 = vector.broadcast %1 : vector<96x1xf32> to vector<96x128xf32>
    %6 = arith.addf %4, %5 : vector<96x128xf32>
    %7 = vector.extract_strided_slice %6 {offsets = [0, 0], sizes = [32, 128], strides = [1, 1]} : vector<96x128xf32> to vector<32x128xf32>
    %8 = vector.extract_strided_slice %6 {offsets = [32, 0], sizes = [32, 128], strides = [1, 1]} : vector<96x128xf32> to vector<32x128xf32>
    %9 = vector.extract_strided_slice %6 {offsets = [64, 0], sizes = [32, 128], strides = [1, 1]} : vector<96x128xf32> to vector<32x128xf32>
    %10 = arith.subf %8, %7 : vector<32x128xf32>
    %11 = vector.extract_strided_slice %2 {offsets = [0, 128], sizes = [4, 128], strides = [1, 1]} : vector<4x256xbf16> to vector<4x128xbf16>
    %cst_5 = arith.constant dense<0.000000e+00> : vector<96x128xf32>
    %12 = tpu.matmul %0, %11, %cst_5 {dimension_numbers = #tpu.dot_dimension_numbers<[1], [0], [0], [1], [0, 0, 1, 1], [], []>} : vector<96x4xbf16>, vector<4x128xbf16>, vector<96x128xf32> -> vector<96x128xf32>
    %13 = vector.broadcast %1 : vector<96x1xf32> to vector<96x128xf32>
    %14 = arith.addf %12, %13 : vector<96x128xf32>
    %15 = vector.extract_strided_slice %14 {offsets = [0, 0], sizes = [32, 128], strides = [1, 1]} : vector<96x128xf32> to vector<32x128xf32>
    %16 = vector.extract_strided_slice %14 {offsets = [32, 0], sizes = [32, 128], strides = [1, 1]} : vector<96x128xf32> to vector<32x128xf32>
    %17 = vector.extract_strided_slice %14 {offsets = [64, 0], sizes = [32, 128], strides = [1, 1]} : vector<96x128xf32> to vector<32x128xf32>
    %18 = arith.subf %16, %15 : vector<32x128xf32>
    %c0_6 = arith.constant 0 : index
    %c0_7 = arith.constant 0 : index
    %c0_8 = arith.constant 0 : index
    %19 = vector.load %arg4[%c0_6, %c0_7, %c0_8] : memref<3x32x32xbf16, #tpu.memory_space<vmem>>, vector<1x32x32xbf16>
    %20 = vector.shape_cast %19 : vector<1x32x32xbf16> to vector<32x32xbf16>
    %c0_9 = arith.constant 0 : index
    %c0_10 = arith.constant 0 : index
    %c0_11 = arith.constant 0 : index
    %21 = vector.load %arg5[%c0_9, %c0_10, %c0_11] : memref<3x32x1xf32, #tpu.memory_space<vmem>>, vector<1x32x1xf32>
    %22 = vector.shape_cast %21 : vector<1x32x1xf32> to vector<32x1xf32>
    %23 = arith.truncf %9 : vector<32x128xf32> to vector<32x128xbf16>
    %cst_12 = arith.constant dense<0.000000e+00> : vector<32x128xf32>
    %24 = tpu.matmul %20, %23, %cst_12 {dimension_numbers = #tpu.dot_dimension_numbers<[1], [0], [0], [1], [0, 0, 1, 1], [], []>} : vector<32x32xbf16>, vector<32x128xbf16>, vector<32x128xf32> -> vector<32x128xf32>
    %25 = vector.broadcast %22 : vector<32x1xf32> to vector<32x128xf32>
    %26 = arith.addf %24, %25 : vector<32x128xf32>
    %27 = arith.truncf %17 : vector<32x128xf32> to vector<32x128xbf16>
    %cst_13 = arith.constant dense<0.000000e+00> : vector<32x128xf32>
    %28 = tpu.matmul %20, %27, %cst_13 {dimension_numbers = #tpu.dot_dimension_numbers<[1], [0], [0], [1], [0, 0, 1, 1], [], []>} : vector<32x32xbf16>, vector<32x128xbf16>, vector<32x128xf32> -> vector<32x128xf32>
    %29 = vector.broadcast %22 : vector<32x1xf32> to vector<32x128xf32>
    %30 = arith.addf %28, %29 : vector<32x128xf32>
    %31 = math.tanh %26 : vector<32x128xf32>
    %32 = math.tanh %30 : vector<32x128xf32>
    %33 = arith.mulf %31, %10 : vector<32x128xf32>
    %34 = arith.addf %7, %33 : vector<32x128xf32>
    %35 = arith.mulf %32, %18 : vector<32x128xf32>
    %36 = arith.addf %15, %35 : vector<32x128xf32>
    %c1 = arith.constant 1 : index
    %c0_14 = arith.constant 0 : index
    %c0_15 = arith.constant 0 : index
    %37 = vector.load %arg4[%c1, %c0_14, %c0_15] : memref<3x32x32xbf16, #tpu.memory_space<vmem>>, vector<1x32x32xbf16>
    %38 = vector.shape_cast %37 : vector<1x32x32xbf16> to vector<32x32xbf16>
    %c1_16 = arith.constant 1 : index
    %c0_17 = arith.constant 0 : index
    %c0_18 = arith.constant 0 : index
    %39 = vector.load %arg5[%c1_16, %c0_17, %c0_18] : memref<3x32x1xf32, #tpu.memory_space<vmem>>, vector<1x32x1xf32>
    %40 = vector.shape_cast %39 : vector<1x32x1xf32> to vector<32x1xf32>
    %41 = arith.truncf %34 : vector<32x128xf32> to vector<32x128xbf16>
    %cst_19 = arith.constant dense<0.000000e+00> : vector<32x128xf32>
    %42 = tpu.matmul %38, %41, %cst_19 {dimension_numbers = #tpu.dot_dimension_numbers<[1], [0], [0], [1], [0, 0, 1, 1], [], []>} : vector<32x32xbf16>, vector<32x128xbf16>, vector<32x128xf32> -> vector<32x128xf32>
    %43 = vector.broadcast %40 : vector<32x1xf32> to vector<32x128xf32>
    %44 = arith.addf %42, %43 : vector<32x128xf32>
    %45 = arith.truncf %36 : vector<32x128xf32> to vector<32x128xbf16>
    %cst_20 = arith.constant dense<0.000000e+00> : vector<32x128xf32>
    %46 = tpu.matmul %38, %45, %cst_20 {dimension_numbers = #tpu.dot_dimension_numbers<[1], [0], [0], [1], [0, 0, 1, 1], [], []>} : vector<32x32xbf16>, vector<32x128xbf16>, vector<32x128xf32> -> vector<32x128xf32>
    %47 = vector.broadcast %40 : vector<32x1xf32> to vector<32x128xf32>
    %48 = arith.addf %46, %47 : vector<32x128xf32>
    %49 = math.tanh %44 : vector<32x128xf32>
    %50 = math.tanh %48 : vector<32x128xf32>
    %51 = arith.mulf %49, %10 : vector<32x128xf32>
    %52 = arith.addf %7, %51 : vector<32x128xf32>
    %53 = arith.mulf %50, %18 : vector<32x128xf32>
    %54 = arith.addf %15, %53 : vector<32x128xf32>
    %c2 = arith.constant 2 : index
    %c0_21 = arith.constant 0 : index
    %c0_22 = arith.constant 0 : index
    %55 = vector.load %arg4[%c2, %c0_21, %c0_22] : memref<3x32x32xbf16, #tpu.memory_space<vmem>>, vector<1x32x32xbf16>
    %56 = vector.shape_cast %55 : vector<1x32x32xbf16> to vector<32x32xbf16>
    %c2_23 = arith.constant 2 : index
    %c0_24 = arith.constant 0 : index
    %c0_25 = arith.constant 0 : index
    %57 = vector.load %arg5[%c2_23, %c0_24, %c0_25] : memref<3x32x1xf32, #tpu.memory_space<vmem>>, vector<1x32x1xf32>
    %58 = vector.shape_cast %57 : vector<1x32x1xf32> to vector<32x1xf32>
    %59 = arith.truncf %52 : vector<32x128xf32> to vector<32x128xbf16>
    %cst_26 = arith.constant dense<0.000000e+00> : vector<32x128xf32>
    %60 = tpu.matmul %56, %59, %cst_26 {dimension_numbers = #tpu.dot_dimension_numbers<[1], [0], [0], [1], [0, 0, 1, 1], [], []>} : vector<32x32xbf16>, vector<32x128xbf16>, vector<32x128xf32> -> vector<32x128xf32>
    %61 = vector.broadcast %58 : vector<32x1xf32> to vector<32x128xf32>
    %62 = arith.addf %60, %61 : vector<32x128xf32>
    %63 = arith.truncf %54 : vector<32x128xf32> to vector<32x128xbf16>
    %cst_27 = arith.constant dense<0.000000e+00> : vector<32x128xf32>
    %64 = tpu.matmul %56, %63, %cst_27 {dimension_numbers = #tpu.dot_dimension_numbers<[1], [0], [0], [1], [0, 0, 1, 1], [], []>} : vector<32x32xbf16>, vector<32x128xbf16>, vector<32x128xf32> -> vector<32x128xf32>
    %65 = vector.broadcast %58 : vector<32x1xf32> to vector<32x128xf32>
    %66 = arith.addf %64, %65 : vector<32x128xf32>
    %67 = math.tanh %62 : vector<32x128xf32>
    %68 = math.tanh %66 : vector<32x128xf32>
    %69 = arith.mulf %67, %10 : vector<32x128xf32>
    %70 = arith.addf %7, %69 : vector<32x128xf32>
    %71 = arith.mulf %68, %18 : vector<32x128xf32>
    %72 = arith.addf %15, %71 : vector<32x128xf32>
    %c0_28 = arith.constant 0 : index
    %c0_29 = arith.constant 0 : index
    %73 = vector.load %arg6[%c0_28, %c0_29] : memref<8x32xbf16, #tpu.memory_space<vmem>>, vector<8x32xbf16>
    %c0_30 = arith.constant 0 : index
    %c0_31 = arith.constant 0 : index
    %74 = vector.load %arg7[%c0_30, %c0_31] : memref<8x1xf32, #tpu.memory_space<vmem>>, vector<8x1xf32>
    %75 = arith.truncf %70 : vector<32x128xf32> to vector<32x128xbf16>
    %cst_32 = arith.constant dense<0.000000e+00> : vector<8x128xf32>
    %76 = tpu.matmul %73, %75, %cst_32 {dimension_numbers = #tpu.dot_dimension_numbers<[1], [0], [0], [1], [0, 0, 1, 1], [], []>} : vector<8x32xbf16>, vector<32x128xbf16>, vector<8x128xf32> -> vector<8x128xf32>
    %77 = vector.broadcast %74 : vector<8x1xf32> to vector<8x128xf32>
    %78 = arith.addf %76, %77 : vector<8x128xf32>
    %c0_33 = arith.constant 0 : index
    %c0_34 = arith.constant 0 : index
    %79 = vector.load %arg8[%c0_33, %c0_34] : memref<8x256xf32, #tpu.memory_space<vmem>>, vector<8x128xf32>
    tpu.vector_store %arg8[%c0_33, %c0_34], %78 {strides = array<i32>} : memref<8x256xf32, #tpu.memory_space<vmem>>, vector<8x128xf32>,
    %80 = arith.truncf %72 : vector<32x128xf32> to vector<32x128xbf16>
    %cst_35 = arith.constant dense<0.000000e+00> : vector<8x128xf32>
    %81 = tpu.matmul %73, %80, %cst_35 {dimension_numbers = #tpu.dot_dimension_numbers<[1], [0], [0], [1], [0, 0, 1, 1], [], []>} : vector<8x32xbf16>, vector<32x128xbf16>, vector<8x128xf32> -> vector<8x128xf32>
    %82 = vector.broadcast %74 : vector<8x1xf32> to vector<8x128xf32>
    %83 = arith.addf %81, %82 : vector<8x128xf32>
    %c0_36 = arith.constant 0 : index
    %c128 = arith.constant 128 : index
    %84 = vector.load %arg8[%c0_36, %c128] : memref<8x256xf32, #tpu.memory_space<vmem>>, vector<8x128xf32>
    tpu.vector_store %arg8[%c0_36, %c128], %83 {strides = array<i32>} : memref<8x256xf32, #tpu.memory_space<vmem>>, vector<8x128xf32>,
    return
  }
  func.func @transform_0(%arg0: i32) -> (i32, i32) {
    %c0_i32 = arith.constant 0 : i32
    %c0_i32_0 = arith.constant 0 : i32
    return %c0_i32, %arg0 : i32, i32
  }
  func.func @transform_1(%arg0: i32) -> (i32, i32) {
    %c0_i32 = arith.constant 0 : i32
    %c0_i32_0 = arith.constant 0 : i32
    %c0_i32_1 = arith.constant 0 : i32
    return %c0_i32, %c0_i32_0 : i32, i32
  }
  func.func @transform_2(%arg0: i32) -> (i32, i32) {
    %c0_i32 = arith.constant 0 : i32
    %c0_i32_0 = arith.constant 0 : i32
    %c0_i32_1 = arith.constant 0 : i32
    return %c0_i32, %c0_i32_0 : i32, i32
  }
  func.func @transform_3(%arg0: i32) -> (i32, i32, i32) {
    %c0_i32 = arith.constant 0 : i32
    %c0_i32_0 = arith.constant 0 : i32
    %c0_i32_1 = arith.constant 0 : i32
    %c0_i32_2 = arith.constant 0 : i32
    return %c0_i32, %c0_i32_0, %c0_i32_1 : i32, i32, i32
  }
  func.func @transform_4(%arg0: i32) -> (i32, i32, i32) {
    %c0_i32 = arith.constant 0 : i32
    %c0_i32_0 = arith.constant 0 : i32
    %c0_i32_1 = arith.constant 0 : i32
    %c0_i32_2 = arith.constant 0 : i32
    return %c0_i32, %c0_i32_0, %c0_i32_1 : i32, i32, i32
  }
  func.func @transform_5(%arg0: i32) -> (i32, i32) {
    %c0_i32 = arith.constant 0 : i32
    %c0_i32_0 = arith.constant 0 : i32
    %c0_i32_1 = arith.constant 0 : i32
    return %c0_i32, %c0_i32_0 : i32, i32
  }
  func.func @transform_6(%arg0: i32) -> (i32, i32) {
    %c0_i32 = arith.constant 0 : i32
    %c0_i32_0 = arith.constant 0 : i32
    %c0_i32_1 = arith.constant 0 : i32
    return %c0_i32, %c0_i32_0 : i32, i32
  }
  func.func @transform_7(%arg0: i32) -> (i32, i32) {
    %c0_i32 = arith.constant 0 : i32
    %c0_i32_0 = arith.constant 0 : i32
    return %c0_i32, %arg0 : i32, i32
  }
}

</mosaic_0001>

<llo_original>
// kernel: tpu_custom_call.1
$region0: #{tpu_custom_call.1}
  #allocation0 [shape = 'u32[]', space=smem, size = 0x4, offset = 0x4, fixed_abs, tag = 'smem constant byte address 0x4 - core index']
  #allocation1 [shape = 'u32[144,128]{1,0:T(1,128)}', space=vmem, size = 0x12000, scoped, tag = 'internal scratch']
  %s0 = inlined_call_operand.vmem [shape: bf16[4,512], index: 0, kind: input, shape index: {}]
  %s1 = inlined_call_operand.vmem [shape: bf16[96,4], index: 1, kind: input, shape index: {}]
  %s2 = inlined_call_operand.vmem [shape: f32[96,1], index: 2, kind: input, shape index: {}]
  %s3 = inlined_call_operand.vmem [shape: bf16[3,32,32], index: 3, kind: input, shape index: {}]
  %s4 = inlined_call_operand.vmem [shape: f32[3,32,1], index: 4, kind: input, shape index: {}]
  %s5 = inlined_call_operand.vmem [shape: bf16[8,32], index: 5, kind: input, shape index: {}]
  %s6 = inlined_call_operand.vmem [shape: f32[8,1], index: 6, kind: input, shape index: {}]
  %s7 = inlined_call_operand.hbm [shape: f32[8,512], index: 7, kind: output, shape index: {}]
  %s8 = sld [smem:[#allocation0]]
  $region61: #{tpu_custom_call.1} parent=0
    _
  %s10 = ssub.s32 1, %s8
  %s11 = scalar_select 0, %s10, %s8
  $region1: #{tpu_custom_call.1} parent=0
    #allocation2 [shape = 'u8[16384]{0}', space=vmem, size = 0x4000, scoped, tag = 'output window, operand 0']
    #allocation3 [shape = 's32[2]{0}', space=sflag, size = 0x8, scoped, tag = 'scoped memory for tpu_custom_call.1']
    %12 = vsyncpa [#allocation3], 0
    %s13 = scalar_lea.sflag [#allocation3], 1
    %14 = vsyncpa %s13, 0
    loop: start=0, step=1, limit=4
    $region2: #{tpu_custom_call.1} parent=1 // loop_pre_header
      _
    $region3: #{tpu_custom_call.1} parent=1 // loop_header
      %s16 = sphi 0, %s20
      %p17 = scmp.ge.s32.totalorder %s16, 4
      %s26 = sphi 0, %s28
      %s29 = sphi 0, %s26
      %s30 = sphi 0, %s29
      %s46 = sphi 0, %s30
      %s50 = sphi 0, %s50
      %s52 = sphi 0, %s50
      %s53 = sphi 0, %s52
      %s67 = sphi 0, %s53
      %s71 = sphi 0, %s71
      %s73 = sphi 0, %s71
      %s74 = sphi 0, %s73
      %s88 = sphi 0, %s74
      %s92 = sphi 0, %s92
      %s94 = sphi 0, %s92
      %s95 = sphi 0, %s94
      %s109 = sphi 0, %s95
      %s113 = sphi 0, %s113
      %s115 = sphi 0, %s113
      %s116 = sphi 0, %s115
      %s130 = sphi 0, %s116
      %s134 = sphi 0, %s134
      %s136 = sphi 0, %s134
      %s137 = sphi 0, %s136
      %s151 = sphi 0, %s137
      %s155 = sphi 0, %s155
      %s157 = sphi 0, %s155
      %s158 = sphi 0, %s157
      %s172 = sphi 0, %s158
      %s178 = sphi 0, %s180
      %s181 = sphi 0, %s178
      %s182 = sphi 0, %s181
      %s198 = sphi 0, %s182
    $region4: #{tpu_custom_call.1} parent=1 // loop_header_branch
      %19 = sbr.rel (%p17) target = $region8
    $region5: #{tpu_custom_call.1} parent=1 // loop_body
      %s21 = ssub.s32 %s16, 1
      %s22 = ssub.s32 %s16, 2
      %s23 = sadd.s32 %s16, 1
      %s24 = ssub.s32 %s16, %s23
      %p25 = scmp.eq.s32.totalorder %s24, 0
      %s27 = sadd.s32 %s26, 1
      %s28 = scalar_select %p25, %s26, %s27
      %p31 = pneg %p25
      %p32 = scmp.eq.s32.totalorder %s16, 1
      %p33 = por %p31, %p32
      %p34 = scmp.ne.s32.totalorder %s26, %s29
      %p35 = scmp.eq.s32.totalorder %s16, 0
      %p36 = por %p34, %p35
      %p37 = scmp.ne.s32.totalorder %s26, %s29
      %p38 = scmp.eq.s32.totalorder %s21, 1
      %p39 = por %p37, %p38
      %p40 = scmp.ne.s32.totalorder %s29, %s30
      %p41 = scmp.eq.s32.totalorder %s21, 0
      %p42 = por %p40, %p41
      %p43 = scmp.ne.s32.totalorder %s29, %s30
      %p44 = scmp.eq.s32.totalorder %s22, 1
      %p45 = por %p43, %p44
      %p47 = scmp.ne.s32.totalorder %s30, %s46
      %p48 = scmp.eq.s32.totalorder %s22, 0
      %p49 = por %p47, %p48
      %s51 = sadd.s32 %s50, 1
      %p54 = scmp.eq.s32.totalorder %s16, 1
      %p55 = scmp.ne.s32.totalorder %s50, %s52
      %p56 = scmp.eq.s32.totalorder %s16, 0
      %p57 = por %p55, %p56
      %p58 = scmp.ne.s32.totalorder %s50, %s52
      %p59 = scmp.eq.s32.totalorder %s21, 1
      %p60 = por %p58, %p59
      %p61 = scmp.ne.s32.totalorder %s52, %s53
      %p62 = scmp.eq.s32.totalorder %s21, 0
      %p63 = por %p61, %p62
      %p64 = scmp.ne.s32.totalorder %s52, %s53
      %p65 = scmp.eq.s32.totalorder %s22, 1
      %p66 = por %p64, %p65
      %p68 = scmp.ne.s32.totalorder %s53, %s67
      %p69 = scmp.eq.s32.totalorder %s22, 0
      %p70 = por %p68, %p69
      %s72 = sadd.s32 %s71, 1
      %p75 = scmp.eq.s32.totalorder %s16, 1
      %p76 = scmp.ne.s32.totalorder %s71, %s73
      %p77 = scmp.eq.s32.totalorder %s16, 0
      %p78 = por %p76, %p77
      %p79 = scmp.ne.s32.totalorder %s71, %s73
      %p80 = scmp.eq.s32.totalorder %s21, 1
      %p81 = por %p79, %p80
      %p82 = scmp.ne.s32.totalorder %s73, %s74
      %p83 = scmp.eq.s32.totalorder %s21, 0
      %p84 = por %p82, %p83
      %p85 = scmp.ne.s32.totalorder %s73, %s74
      %p86 = scmp.eq.s32.totalorder %s22, 1
      %p87 = por %p85, %p86
      %p89 = scmp.ne.s32.totalorder %s74, %s88
      %p90 = scmp.eq.s32.totalorder %s22, 0
      %p91 = por %p89, %p90
      %s93 = sadd.s32 %s92, 1
      %p96 = scmp.eq.s32.totalorder %s16, 1
      %p97 = scmp.ne.s32.totalorder %s92, %s94
      %p98 = scmp.eq.s32.totalorder %s16, 0
      %p99 = por %p97, %p98
      %p100 = scmp.ne.s32.totalorder %s92, %s94
      %p101 = scmp.eq.s32.totalorder %s21, 1
      %p102 = por %p100, %p101
      %p103 = scmp.ne.s32.totalorder %s94, %s95
      %p104 = scmp.eq.s32.totalorder %s21, 0
      %p105 = por %p103, %p104
      %p106 = scmp.ne.s32.totalorder %s94, %s95
      %p107 = scmp.eq.s32.totalorder %s22, 1
      %p108 = por %p106, %p107
      %p110 = scmp.ne.s32.totalorder %s95, %s109
      %p111 = scmp.eq.s32.totalorder %s22, 0
      %p112 = por %p110, %p111
      %s114 = sadd.s32 %s113, 1
      %p117 = scmp.eq.s32.totalorder %s16, 1
      %p118 = scmp.ne.s32.totalorder %s113, %s115
      %p119 = scmp.eq.s32.totalorder %s16, 0
      %p120 = por %p118, %p119
      %p121 = scmp.ne.s32.totalorder %s113, %s115
      %p122 = scmp.eq.s32.totalorder %s21, 1
      %p123 = por %p121, %p122
      %p124 = scmp.ne.s32.totalorder %s115, %s116
      %p125 = scmp.eq.s32.totalorder %s21, 0
      %p126 = por %p124, %p125
      %p127 = scmp.ne.s32.totalorder %s115, %s116
      %p128 = scmp.eq.s32.totalorder %s22, 1
      %p129 = por %p127, %p128
      %p131 = scmp.ne.s32.totalorder %s116, %s130
      %p132 = scmp.eq.s32.totalorder %s22, 0
      %p133 = por %p131, %p132
      %s135 = sadd.s32 %s134, 1
      %p138 = scmp.eq.s32.totalorder %s16, 1
      %p139 = scmp.ne.s32.totalorder %s134, %s136
      %p140 = scmp.eq.s32.totalorder %s16, 0
      %p141 = por %p139, %p140
      %p142 = scmp.ne.s32.totalorder %s134, %s136
      %p143 = scmp.eq.s32.totalorder %s21, 1
      %p144 = por %p142, %p143
      %p145 = scmp.ne.s32.totalorder %s136, %s137
      %p146 = scmp.eq.s32.totalorder %s21, 0
      %p147 = por %p145, %p146
      %p148 = scmp.ne.s32.totalorder %s136, %s137
      %p149 = scmp.eq.s32.totalorder %s22, 1
      %p150 = por %p148, %p149
      %p152 = scmp.ne.s32.totalorder %s137, %s151
      %p153 = scmp.eq.s32.totalorder %s22, 0
      %p154 = por %p152, %p153
      %s156 = sadd.s32 %s155, 1
      %p159 = scmp.eq.s32.totalorder %s16, 1
      %p160 = scmp.ne.s32.totalorder %s155, %s157
      %p161 = scmp.eq.s32.totalorder %s16, 0
      %p162 = por %p160, %p161
      %p163 = scmp.ne.s32.totalorder %s155, %s157
      %p164 = scmp.eq.s32.totalorder %s21, 1
      %p165 = por %p163, %p164
      %p166 = scmp.ne.s32.totalorder %s157, %s158
      %p167 = scmp.eq.s32.totalorder %s21, 0
      %p168 = por %p166, %p167
      %p169 = scmp.ne.s32.totalorder %s157, %s158
      %p170 = scmp.eq.s32.totalorder %s22, 1
      %p171 = por %p169, %p170
      %p173 = scmp.ne.s32.totalorder %s158, %s172
      %p174 = scmp.eq.s32.totalorder %s22, 0
      %p175 = por %p173, %p174
      %s176 = ssub.s32 %s16, %s23
      %p177 = scmp.eq.s32.totalorder %s176, 0
      %s179 = sadd.s32 %s178, 1
      %s180 = scalar_select %p177, %s178, %s179
      %p183 = pneg %p177
      %p184 = scmp.eq.s32.totalorder %s16, 1
      %p185 = por %p183, %p184
      %p186 = scmp.ne.s32.totalorder %s178, %s181
      %p187 = scmp.eq.s32.totalorder %s16, 0
      %p188 = por %p186, %p187
      %p189 = scmp.ne.s32.totalorder %s178, %s181
      %p190 = scmp.eq.s32.totalorder %s21, 1
      %p191 = por %p189, %p190
      %p192 = scmp.ne.s32.totalorder %s181, %s182
      %p193 = scmp.eq.s32.totalorder %s21, 0
      %p194 = por %p192, %p193
      %p195 = scmp.ne.s32.totalorder %s181, %s182
      %p196 = scmp.eq.s32.totalorder %s22, 1
      %p197 = por %p195, %p196
      %p199 = scmp.ne.s32.totalorder %s182, %s198
      %p200 = scmp.eq.s32.totalorder %s22, 0
      %p201 = por %p199, %p200
      %p202 = scmp.le.s32.totalorder 1, %s16
      %p203 = scmp.lt.s32.totalorder %s16, 3
      %p204 = pnand %p202, %p203
      %p205 = pneg %p204
      // Predicated region
      $region9: #{tpu_custom_call.1} parent=5 // pred_check
        _
      $region10: #{tpu_custom_call.1} parent=5 // pred_check_branch
        %207 = sbr.rel (%p204) target = $region12
      $region11: #{tpu_custom_call.1} parent=5 // pred_region
        %s208 = ssub.s32 %s16, 1
        // Predicated region
        $region13: #{tpu_custom_call.1} parent=11 // pred_check
          %p209 = pneg %p63
        $region14: #{tpu_custom_call.1} parent=11 // pred_check_branch
          %211 = sbr.rel (%p209) target = $region16
        $region15: #{tpu_custom_call.1} parent=11 // pred_region
          _
        $region16: #{tpu_custom_call.1} parent=11 // pred_fallthru
          _
        // Predicated region
        $region17: #{tpu_custom_call.1} parent=11 // pred_check
          %p212 = pneg %p84
        $region18: #{tpu_custom_call.1} parent=11 // pred_check_branch
          %214 = sbr.rel (%p212) target = $region20
        $region19: #{tpu_custom_call.1} parent=11 // pred_region
          _
        $region20: #{tpu_custom_call.1} parent=11 // pred_fallthru
          _
        // Predicated region
        $region21: #{tpu_custom_call.1} parent=11 // pred_check
          %p215 = pneg %p105
        $region22: #{tpu_custom_call.1} parent=11 // pred_check_branch
          %217 = sbr.rel (%p215) target = $region24
        $region23: #{tpu_custom_call.1} parent=11 // pred_region
          _
        $region24: #{tpu_custom_call.1} parent=11 // pred_fallthru
          _
        // Predicated region
        $region25: #{tpu_custom_call.1} parent=11 // pred_check
          %p218 = pneg %p126
        $region26: #{tpu_custom_call.1} parent=11 // pred_check_branch
          %220 = sbr.rel (%p218) target = $region28
        $region27: #{tpu_custom_call.1} parent=11 // pred_region
          _
        $region28: #{tpu_custom_call.1} parent=11 // pred_fallthru
          _
        // Predicated region
        $region29: #{tpu_custom_call.1} parent=11 // pred_check
          %p221 = pneg %p147
        $region30: #{tpu_custom_call.1} parent=11 // pred_check_branch
          %223 = sbr.rel (%p221) target = $region32
        $region31: #{tpu_custom_call.1} parent=11 // pred_region
          _
        $region32: #{tpu_custom_call.1} parent=11 // pred_fallthru
          _
        // Predicated region
        $region33: #{tpu_custom_call.1} parent=11 // pred_check
          %p224 = pneg %p168
        $region34: #{tpu_custom_call.1} parent=11 // pred_check_branch
          %226 = sbr.rel (%p224) target = $region36
        $region35: #{tpu_custom_call.1} parent=11 // pred_region
          _
        $region36: #{tpu_custom_call.1} parent=11 // pred_fallthru
          _
      $region12: #{tpu_custom_call.1} parent=5 // pred_fallthru
        _
      %p227 = scmp.lt.s32.totalorder %s16, 2
      // Predicated region
      $region37: #{tpu_custom_call.1} parent=5 // pred_check
        %p228 = pneg %p227
      $region38: #{tpu_custom_call.1} parent=5 // pred_check_branch
        %230 = sbr.rel (%p228) target = $region40
      $region39: #{tpu_custom_call.1} parent=5 // pred_region
        // Predicated region
        $region41: #{tpu_custom_call.1} parent=39 // pred_check
          %p231 = pneg %p36
        $region42: #{tpu_custom_call.1} parent=39 // pred_check_branch
          %233 = sbr.rel (%p231) target = $region44
        $region43: #{tpu_custom_call.1} parent=39 // pred_region
          %s234 = smul.u32 2, %s16
          %p235 = scmp.lt.s32.totalorder %s234, 3
          %s236 = scalar_select %p235, %s234, 3
          %s237 = smul.addr %s236, 2
          %s238 = scalar_lea.vmem %s0, %s237
          %s239 = smul.u32 2, %s16
        $region44: #{tpu_custom_call.1} parent=39 // pred_fallthru
          _
      $region40: #{tpu_custom_call.1} parent=5 // pred_fallthru
        _
      %p240 = scmp.le.s32.totalorder 1, %s16
      %p241 = scmp.lt.s32.totalorder %s16, 3
      %p242 = pnand %p240, %p241
      %p243 = pneg %p242
      // Predicated region
      $region45: #{tpu_custom_call.1} parent=5 // pred_check
        _
      $region46: #{tpu_custom_call.1} parent=5 // pred_check_branch
        %245 = sbr.rel (%p242) target = $region48
      $region47: #{tpu_custom_call.1} parent=5 // pred_region
        %s246 = ssub.s32 %s16, 1
        %s247 = smul.u32 2, %s21
        %p248 = scmp.lt.s32.totalorder %s247, 3
        %s249 = scalar_select %p248, %s247, 3
        %s250 = smul.addr %s249, 2
        %s251 = scalar_lea.vmem %s0, %s250
        %p252 = pneg %p42
        %p253 = pneg %p39
        %p254 = pneg %p63
        %p255 = pneg %p60
        %p256 = pneg %p84
        %p257 = pneg %p81
        %p258 = pneg %p105
        %p259 = pneg %p102
        %p260 = pneg %p126
        %p261 = pneg %p123
        %p262 = pneg %p147
        %p263 = pneg %p144
        %p264 = pneg %p168
        %p265 = pneg %p165
        %p266 = pneg %p194
        %p267 = pneg %p191
        %s268 = sand.u32 %s181, 1
        %s269 = scalar_lea.sflag [#allocation3], %s268
        %s270 = sand.u32 %s181, 1
        %s271 = smul.addr %s270, 16
        %s272 = scalar_lea.vmem [#allocation2], %s271
        %s273 = smul.u32 2, %s21
        %p274 = scmp.lt.s32.totalorder %s273, 3
        %s275 = scalar_select %p274, %s273, 3
        %s276 = smul.addr %s275, 2
        %s277 = scalar_lea.vmem %s0, %s276
        %s278 = smul.u32 2, %s21
        %s279 = smul.u32 2, %s21
        %v281 = vld [vmem:[%s1] sm:$0xf]
        %v282 = vld [vmem:[%s1 + $0x4] sm:$0xf]
        %v283 = vld [vmem:[%s1 + $0x8] sm:$0xf]
        %v284 = vld [vmem:[%s1 + $0xc] sm:$0xf]
        %v285 = vld [vmem:[%s1 + $0x10] sm:$0xf]
        %v286 = vld [vmem:[%s1 + $0x14] sm:$0xf]
        %v287 = vld [vmem:[%s1 + $0x18] sm:$0xf]
        %v288 = vld [vmem:[%s1 + $0x1c] sm:$0xf]
        %v289 = vld [vmem:[%s1 + $0x20] sm:$0xf]
        %v290 = vld [vmem:[%s1 + $0x24] sm:$0xf]
        %v291 = vld [vmem:[%s1 + $0x28] sm:$0xf]
        %v292 = vld [vmem:[%s1 + $0x2c] sm:$0xf]
        %v293 = vld [vmem:[%s2] sm:$0xff]
        %v294 = vld [vmem:[%s2 + $0x8] sm:$0xff]
        %v295 = vld [vmem:[%s2 + $0x10] sm:$0xff]
        %v296 = vld [vmem:[%s2 + $0x18] sm:$0xff]
        %v297 = vld [vmem:[%s2 + $0x20] sm:$0xff]
        %v298 = vld [vmem:[%s2 + $0x28] sm:$0xff]
        %v299 = vld [vmem:[%s2 + $0x30] sm:$0xff]
        %v300 = vld [vmem:[%s2 + $0x38] sm:$0xff]
        %v301 = vld [vmem:[%s2 + $0x40] sm:$0xff]
        %v302 = vld [vmem:[%s2 + $0x48] sm:$0xff]
        %v303 = vld [vmem:[%s2 + $0x50] sm:$0xff]
        %v304 = vld [vmem:[%s2 + $0x58] sm:$0xff]
        %v305 = vld [vmem:[%s277] sm:$0xf]
        %307 = vset.pattern.permute.xlu0 0
        %308 = vperm.xlu0 %307, %v293
        %v309 = vpop.permute.xlu0 %308
        %312 = vset.pattern.permute.xlu0 0
        %313 = vperm.xlu0 %312, %v294
        %v314 = vpop.permute.xlu0 %313
        %317 = vset.pattern.permute.xlu0 0
        %318 = vperm.xlu0 %317, %v295
        %v319 = vpop.permute.xlu0 %318
        %322 = vset.pattern.permute.xlu0 0
        %323 = vperm.xlu0 %322, %v296
        %v324 = vpop.permute.xlu0 %323
        %327 = vset.pattern.permute.xlu0 0
        %328 = vperm.xlu0 %327, %v297
        %v329 = vpop.permute.xlu0 %328
        %332 = vset.pattern.permute.xlu0 0
        %333 = vperm.xlu0 %332, %v298
        %v334 = vpop.permute.xlu0 %333
        %337 = vset.pattern.permute.xlu0 0
        %338 = vperm.xlu0 %337, %v299
        %v339 = vpop.permute.xlu0 %338
        %342 = vset.pattern.permute.xlu0 0
        %343 = vperm.xlu0 %342, %v300
        %v344 = vpop.permute.xlu0 %343
        %347 = vset.pattern.permute.xlu0 0
        %348 = vperm.xlu0 %347, %v301
        %v349 = vpop.permute.xlu0 %348
        %352 = vset.pattern.permute.xlu0 0
        %353 = vperm.xlu0 %352, %v302
        %v354 = vpop.permute.xlu0 %353
        %357 = vset.pattern.permute.xlu0 0
        %358 = vperm.xlu0 %357, %v303
        %v359 = vpop.permute.xlu0 %358
        %362 = vset.pattern.permute.xlu0 0
        %363 = vperm.xlu0 %362, %v304
        %v364 = vpop.permute.xlu0 %363
        %v378 = vunpack.c.l.b16 %v281
        %v379 = vunpack.c.l.b16 %v282
        %v380 = vunpack.c.l.b16 %v283
        %v381 = vunpack.c.l.b16 %v284
        %v382 = vunpack.c.l.b16 %v285
        %v383 = vunpack.c.l.b16 %v286
        %v384 = vunpack.c.l.b16 %v287
        %v385 = vunpack.c.l.b16 %v288
        %v386 = vunpack.c.l.b16 %v289
        %v387 = vunpack.c.l.b16 %v290
        %v388 = vunpack.c.l.b16 %v291
        %v389 = vunpack.c.l.b16 %v292
        %v390 = vpack.c.b16 %v379, %v378
        %v391 = vpack.c.b16 %v381, %v380
        %v392 = vpack.c.b16 %v383, %v382
        %v393 = vpack.c.b16 %v385, %v384
        %v394 = vpack.c.b16 %v387, %v386
        %v395 = vpack.c.b16 %v389, %v388
        %vm396 = vcmask 31744
        %v398 = vsel %vm396, %v390, 0
        %v401 = vsel %vm396, %v391, 0
        %v404 = vsel %vm396, %v392, 0
        %v407 = vsel %vm396, %v393, 0
        %v410 = vsel %vm396, %v394, 0
        %v413 = vsel %vm396, %v395, 0
        %vm415 = vcmask 1041408
        %v417 = vsel %vm415, %v305, 0
        %419 = vmatprep.subr.bf16.mxu0 0
        %420 = vmatpush1.bf16.msra.mxu0 %v417
        %421 = vmatprep.subr.bf16.mxu0 0
        %422 = vmatpush1.bf16.msra.mxu0 0
        %423 = vmatprep.subr.bf16.mxu0 0
        %424 = vmatpush1.bf16.msra.mxu0 0
        %425 = vmatprep.subr.bf16.mxu0 0
        %426 = vmatpush1.bf16.msra.mxu0 0
        %427 = vmatprep.subr.bf16.mxu0 0
        %428 = vmatpush1.bf16.msra.mxu0 0
        %429 = vmatprep.subr.bf16.mxu0 0
        %430 = vmatpush1.bf16.msra.mxu0 0
        %431 = vmatprep.subr.bf16.mxu0 0
        %432 = vmatpush1.bf16.msra.mxu0 0
        %433 = vmatprep.subr.bf16.mxu0 0
        %434 = vmatpush1.bf16.msra.mxu0 0
        %435 = vmatprep.subr.bf16.mxu0 0
        %436 = vmatpush1.bf16.msra.mxu0 0
        %437 = vmatprep.subr.bf16.mxu0 0
        %438 = vmatpush1.bf16.msra.mxu0 0
        %439 = vmatprep.subr.bf16.mxu0 0
        %440 = vmatpush1.bf16.msra.mxu0 0
        %441 = vmatprep.subr.bf16.mxu0 0
        %442 = vmatpush1.bf16.msra.mxu0 0
        %443 = vmatprep.subr.bf16.mxu0 0
        %444 = vmatpush1.bf16.msra.mxu0 0
        %445 = vmatprep.subr.bf16.mxu0 0
        %446 = vmatpush1.bf16.msra.mxu0 0
        %447 = vmatprep.subr.bf16.mxu0 0
        %448 = vmatpush1.bf16.msra.mxu0 0
        %449 = vmatprep.subr.bf16.mxu0 0
        %450 = vmatpush1.bf16.msra.mxu0 0
        %451 = vmatprep.mubr.bf16.mxu0 0
        %452 = vmatmul.mubr.bf16.gmra.mrb[0].mxu0 %v398
        %v453 = vpop.f32.mrb[0].mxu0
        %v454 = vadd.f32 %v309, %v453
        %v455 = vpop.f32.mrb[0].mxu0
        %v456 = vpop.f32.mrb[0].mxu0
        %v457 = vadd.f32 %v314, %v456
        %v458 = vpop.f32.mrb[0].mxu0
        %459 = vmatprep.mubr.bf16.mxu0 0
        %460 = vmatmul.mubr.bf16.gmra.mrb[0].mxu0 %v401
        %v461 = vpop.f32.mrb[0].mxu0
        %v462 = vadd.f32 %v319, %v461
        %v463 = vpop.f32.mrb[0].mxu0
        %v464 = vpop.f32.mrb[0].mxu0
        %v465 = vadd.f32 %v324, %v464
        %v466 = vpop.f32.mrb[0].mxu0
        %467 = vmatprep.mubr.bf16.mxu0 0
        %468 = vmatmul.mubr.bf16.gmra.mrb[0].mxu0 %v404
        %v469 = vpop.f32.mrb[0].mxu0
        %v470 = vadd.f32 %v329, %v469
        %v471 = vpop.f32.mrb[0].mxu0
        %v472 = vpop.f32.mrb[0].mxu0
        %v473 = vadd.f32 %v334, %v472
        %v474 = vpop.f32.mrb[0].mxu0
        %475 = vmatprep.mubr.bf16.mxu0 0
        %476 = vmatmul.mubr.bf16.gmra.mrb[0].mxu0 %v407
        %v477 = vpop.f32.mrb[0].mxu0
        %v478 = vadd.f32 %v339, %v477
        %v479 = vpop.f32.mrb[0].mxu0
        %v480 = vpop.f32.mrb[0].mxu0
        %v481 = vadd.f32 %v344, %v480
        %v482 = vpop.f32.mrb[0].mxu0
        %483 = vmatprep.mubr.bf16.mxu0 0
        %484 = vmatmul.mubr.bf16.gmra.mrb[0].mxu0 %v410
        %v485 = vpop.f32.mrb[0].mxu0
        %v486 = vadd.f32 %v349, %v485
        %v487 = vpop.f32.mrb[0].mxu0
        %v488 = vpop.f32.mrb[0].mxu0
        %v489 = vadd.f32 %v354, %v488
        %v490 = vpop.f32.mrb[0].mxu0
        %491 = vmatprep.mubr.bf16.mxu0 0
        %492 = vmatmul.mubr.bf16.gmra.mrb[0].mxu0 %v413
        %v493 = vpop.f32.mrb[0].mxu0
        %v494 = vadd.f32 %v359, %v493
        %v495 = vpop.f32.mrb[0].mxu0
        %v496 = vpop.f32.mrb[0].mxu0
        %v497 = vadd.f32 %v364, %v496
        %v498 = vpop.f32.mrb[0].mxu0
        %499 = vdwg.mxu0
        %v500 = vsub.f32 %v470, %v454
        %v501 = vsub.f32 %v473, %v457
        %v502 = vsub.f32 %v478, %v462
        %v503 = vsub.f32 %v481, %v465
        %v506 = vunpack.c.l.s4 1983009808
        %v507 = vunpack.c.0.s8 %v506
        %v508 = vlaneseq
        %v509 = vshrl.u32 %v508, 7
        %v510 = vsub.s32 %v507, %v509
        %v511 = vrot.slane %v305, %v510
        %v512 = vcombine.high %v511, %v511
        %v514 = vsel %vm415, %v512, 0
        %516 = vmatprep.subr.bf16.mxu0 0
        %517 = vmatpush1.bf16.msra.mxu0 %v514
        %518 = vmatprep.subr.bf16.mxu0 0
        %519 = vmatpush1.bf16.msra.mxu0 0
        %520 = vmatprep.subr.bf16.mxu0 0
        %521 = vmatpush1.bf16.msra.mxu0 0
        %522 = vmatprep.subr.bf16.mxu0 0
        %523 = vmatpush1.bf16.msra.mxu0 0
        %524 = vmatprep.subr.bf16.mxu0 0
        %525 = vmatpush1.bf16.msra.mxu0 0
        %526 = vmatprep.subr.bf16.mxu0 0
        %527 = vmatpush1.bf16.msra.mxu0 0
        %528 = vmatprep.subr.bf16.mxu0 0
        %529 = vmatpush1.bf16.msra.mxu0 0
        %530 = vmatprep.subr.bf16.mxu0 0
        %531 = vmatpush1.bf16.msra.mxu0 0
        %532 = vmatprep.subr.bf16.mxu0 0
        %533 = vmatpush1.bf16.msra.mxu0 0
        %534 = vmatprep.subr.bf16.mxu0 0
        %535 = vmatpush1.bf16.msra.mxu0 0
        %536 = vmatprep.subr.bf16.mxu0 0
        %537 = vmatpush1.bf16.msra.mxu0 0
        %538 = vmatprep.subr.bf16.mxu0 0
        %539 = vmatpush1.bf16.msra.mxu0 0
        %540 = vmatprep.subr.bf16.mxu0 0
        %541 = vmatpush1.bf16.msra.mxu0 0
        %542 = vmatprep.subr.bf16.mxu0 0
        %543 = vmatpush1.bf16.msra.mxu0 0
        %544 = vmatprep.subr.bf16.mxu0 0
        %545 = vmatpush1.bf16.msra.mxu0 0
        %546 = vmatprep.subr.bf16.mxu0 0
        %547 = vmatpush1.bf16.msra.mxu0 0
        %548 = vmatprep.mubr.bf16.mxu0 0
        %549 = vmatmul.mubr.bf16.gmra.mrb[0].mxu0 %v398
        %v550 = vpop.f32.mrb[0].mxu0
        %v551 = vadd.f32 %v309, %v550
        %v552 = vpop.f32.mrb[0].mxu0
        %v553 = vpop.f32.mrb[0].mxu0
        %v554 = vadd.f32 %v314, %v553
        %v555 = vpop.f32.mrb[0].mxu0
        %556 = vmatprep.mubr.bf16.mxu0 0
        %557 = vmatmul.mubr.bf16.gmra.mrb[0].mxu0 %v401
        %v558 = vpop.f32.mrb[0].mxu0
        %v559 = vadd.f32 %v319, %v558
        %v560 = vpop.f32.mrb[0].mxu0
        %v561 = vpop.f32.mrb[0].mxu0
        %v562 = vadd.f32 %v324, %v561
        %v563 = vpop.f32.mrb[0].mxu0
        %564 = vmatprep.mubr.bf16.mxu0 0
        %565 = vmatmul.mubr.bf16.gmra.mrb[0].mxu0 %v404
        %v566 = vpop.f32.mrb[0].mxu0
        %v567 = vadd.f32 %v329, %v566
        %v568 = vpop.f32.mrb[0].mxu0
        %v569 = vpop.f32.mrb[0].mxu0
        %v570 = vadd.f32 %v334, %v569
        %v571 = vpop.f32.mrb[0].mxu0
        %572 = vmatprep.mubr.bf16.mxu0 0
        %573 = vmatmul.mubr.bf16.gmra.mrb[0].mxu0 %v407
        %v574 = vpop.f32.mrb[0].mxu0
        %v575 = vadd.f32 %v339, %v574
        %v576 = vpop.f32.mrb[0].mxu0
        %v577 = vpop.f32.mrb[0].mxu0
        %v578 = vadd.f32 %v344, %v577
        %v579 = vpop.f32.mrb[0].mxu0
        %580 = vmatprep.mubr.bf16.mxu0 0
        %581 = vmatmul.mubr.bf16.gmra.mrb[0].mxu0 %v410
        %v582 = vpop.f32.mrb[0].mxu0
        %v583 = vadd.f32 %v349, %v582
        %v584 = vpop.f32.mrb[0].mxu0
        %v585 = vpop.f32.mrb[0].mxu0
        %v586 = vadd.f32 %v354, %v585
        %v587 = vpop.f32.mrb[0].mxu0
        %588 = vmatprep.mubr.bf16.mxu0 0
        %589 = vmatmul.mubr.bf16.gmra.mrb[0].mxu0 %v413
        %v590 = vpop.f32.mrb[0].mxu0
        %v591 = vadd.f32 %v359, %v590
        %v592 = vpop.f32.mrb[0].mxu0
        %v593 = vpop.f32.mrb[0].mxu0
        %v594 = vadd.f32 %v364, %v593
        %v595 = vpop.f32.mrb[0].mxu0
        %596 = vdwg.mxu0
        %v597 = vsub.f32 %v567, %v551
        %v598 = vsub.f32 %v570, %v554
        %v599 = vsub.f32 %v575, %v559
        %v600 = vsub.f32 %v578, %v562
        %v601 = vld [vmem:[%s3] sm:$0xf]
        %v602 = vld [vmem:[%s3 + $0x4] sm:$0xf]
        %v603 = vld [vmem:[%s3 + $0x8] sm:$0xf]
        %v604 = vld [vmem:[%s3 + $0xc] sm:$0xf]
        %v605 = vld [vmem:[%s4] sm:$0xff]
        %v606 = vld [vmem:[%s4 + $0x8] sm:$0xff]
        %v607 = vld [vmem:[%s4 + $0x10] sm:$0xff]
        %v608 = vld [vmem:[%s4 + $0x18] sm:$0xff]
        %v609 = vpack.c.bf16 %v489, %v486
        %v610 = vpack.c.bf16 %v497, %v494
        %612 = vset.pattern.permute.xlu0 0
        %613 = vperm.xlu0 %612, %v605
        %v614 = vpop.permute.xlu0 %613
        %617 = vset.pattern.permute.xlu0 0
        %618 = vperm.xlu0 %617, %v606
        %v619 = vpop.permute.xlu0 %618
        %622 = vset.pattern.permute.xlu0 0
        %623 = vperm.xlu0 %622, %v607
        %v624 = vpop.permute.xlu0 %623
        %627 = vset.pattern.permute.xlu0 0
        %628 = vperm.xlu0 %627, %v608
        %v629 = vpop.permute.xlu0 %628
        %v635 = vunpack.c.l.b16 %v601
        %v636 = vunpack.c.l.b16 %v602
        %v637 = vunpack.c.l.b16 %v603
        %v638 = vunpack.c.l.b16 %v604
        %v639 = vpack.c.b16 %v636, %v635
        %v640 = vpack.c.b16 %v638, %v637
        %vm641 = vcmask 261120
        %v643 = vsel %vm641, %v639, 0
        %v646 = vsel %vm641, %v640, 0
        %648 = vmatprep.subr.bf16.mxu0 0
        %649 = vmatpush1.bf16.msra.mxu0 %v609
        %650 = vmatprep.subr.bf16.mxu0 0
        %651 = vmatpush1.bf16.msra.mxu0 %v610
        %652 = vmatprep.subr.bf16.mxu0 0
        %653 = vmatpush1.bf16.msra.mxu0 0
        %654 = vmatprep.subr.bf16.mxu0 0
        %655 = vmatpush1.bf16.msra.mxu0 0
        %656 = vmatprep.subr.bf16.mxu0 0
        %657 = vmatpush1.bf16.msra.mxu0 0
        %658 = vmatprep.subr.bf16.mxu0 0
        %659 = vmatpush1.bf16.msra.mxu0 0
        %660 = vmatprep.subr.bf16.mxu0 0
        %661 = vmatpush1.bf16.msra.mxu0 0
        %662 = vmatprep.subr.bf16.mxu0 0
        %663 = vmatpush1.bf16.msra.mxu0 0
        %664 = vmatprep.subr.bf16.mxu0 0
        %665 = vmatpush1.bf16.msra.mxu0 0
        %666 = vmatprep.subr.bf16.mxu0 0
        %667 = vmatpush1.bf16.msra.mxu0 0
        %668 = vmatprep.subr.bf16.mxu0 0
        %669 = vmatpush1.bf16.msra.mxu0 0
        %670 = vmatprep.subr.bf16.mxu0 0
        %671 = vmatpush1.bf16.msra.mxu0 0
        %672 = vmatprep.subr.bf16.mxu0 0
        %673 = vmatpush1.bf16.msra.mxu0 0
        %674 = vmatprep.subr.bf16.mxu0 0
        %675 = vmatpush1.bf16.msra.mxu0 0
        %676 = vmatprep.subr.bf16.mxu0 0
        %677 = vmatpush1.bf16.msra.mxu0 0
        %678 = vmatprep.subr.bf16.mxu0 0
        %679 = vmatpush1.bf16.msra.mxu0 0
        %680 = vmatprep.mubr.bf16.mxu0 0
        %681 = vmatmul.mubr.bf16.gmra.mrb[0].mxu0 %v643
        %v682 = vpop.f32.mrb[0].mxu0
        %v683 = vadd.f32 %v614, %v682
        %v684 = vpop.f32.mrb[0].mxu0
        %v685 = vpop.f32.mrb[0].mxu0
        %v686 = vadd.f32 %v619, %v685
        %v687 = vpop.f32.mrb[0].mxu0
        %688 = vmatprep.mubr.bf16.mxu0 0
        %689 = vmatmul.mubr.bf16.gmra.mrb[0].mxu0 %v646
        %v690 = vpop.f32.mrb[0].mxu0
        %v691 = vadd.f32 %v624, %v690
        %v692 = vpop.f32.mrb[0].mxu0
        %v693 = vpop.f32.mrb[0].mxu0
        %v694 = vadd.f32 %v629, %v693
        %v695 = vpop.f32.mrb[0].mxu0
        %696 = vdwg.mxu0
        %v697 = vpack.c.bf16 %v586, %v583
        %v698 = vpack.c.bf16 %v594, %v591
        %699 = vmatprep.subr.bf16.mxu0 0
        %700 = vmatpush1.bf16.msra.mxu0 %v697
        %701 = vmatprep.subr.bf16.mxu0 0
        %702 = vmatpush1.bf16.msra.mxu0 %v698
        %703 = vmatprep.subr.bf16.mxu0 0
        %704 = vmatpush1.bf16.msra.mxu0 0
        %705 = vmatprep.subr.bf16.mxu0 0
        %706 = vmatpush1.bf16.msra.mxu0 0
        %707 = vmatprep.subr.bf16.mxu0 0
        %708 = vmatpush1.bf16.msra.mxu0 0
        %709 = vmatprep.subr.bf16.mxu0 0
        %710 = vmatpush1.bf16.msra.mxu0 0
        %711 = vmatprep.subr.bf16.mxu0 0
        %712 = vmatpush1.bf16.msra.mxu0 0
        %713 = vmatprep.subr.bf16.mxu0 0
        %714 = vmatpush1.bf16.msra.mxu0 0
        %715 = vmatprep.subr.bf16.mxu0 0
        %716 = vmatpush1.bf16.msra.mxu0 0
        %717 = vmatprep.subr.bf16.mxu0 0
        %718 = vmatpush1.bf16.msra.mxu0 0
        %719 = vmatprep.subr.bf16.mxu0 0
        %720 = vmatpush1.bf16.msra.mxu0 0
        %721 = vmatprep.subr.bf16.mxu0 0
        %722 = vmatpush1.bf16.msra.mxu0 0
        %723 = vmatprep.subr.bf16.mxu0 0
        %724 = vmatpush1.bf16.msra.mxu0 0
        %725 = vmatprep.subr.bf16.mxu0 0
        %726 = vmatpush1.bf16.msra.mxu0 0
        %727 = vmatprep.subr.bf16.mxu0 0
        %728 = vmatpush1.bf16.msra.mxu0 0
        %729 = vmatprep.subr.bf16.mxu0 0
        %730 = vmatpush1.bf16.msra.mxu0 0
        %731 = vmatprep.mubr.bf16.mxu0 0
        %732 = vmatmul.mubr.bf16.gmra.mrb[0].mxu0 %v643
        %v733 = vpop.f32.mrb[0].mxu0
        %v734 = vadd.f32 %v614, %v733
        %v735 = vpop.f32.mrb[0].mxu0
        %v736 = vpop.f32.mrb[0].mxu0
        %v737 = vadd.f32 %v619, %v736
        %v738 = vpop.f32.mrb[0].mxu0
        %739 = vmatprep.mubr.bf16.mxu0 0
        %740 = vmatmul.mubr.bf16.gmra.mrb[0].mxu0 %v646
        %v741 = vpop.f32.mrb[0].mxu0
        %v742 = vadd.f32 %v624, %v741
        %v743 = vpop.f32.mrb[0].mxu0
        %v744 = vpop.f32.mrb[0].mxu0
        %v745 = vadd.f32 %v629, %v744
        %v746 = vpop.f32.mrb[0].mxu0
        %747 = vdwg.mxu0
        %v748 = vtanh.pop %v683
        %v749 = vtanh.pop %v686
        %v750 = vtanh.pop %v691
        %v751 = vtanh.pop %v694
        %v752 = vtanh.pop %v734
        %v753 = vtanh.pop %v737
        %v754 = vtanh.pop %v742
        %v755 = vtanh.pop %v745
        %v756 = vmul.f32 %v748, %v500
        %v757 = vmul.f32 %v749, %v501
        %v758 = vmul.f32 %v750, %v502
        %v759 = vmul.f32 %v751, %v503
        %v760 = vadd.f32 %v454, %v756
        %v761 = vadd.f32 %v457, %v757
        %v762 = vadd.f32 %v462, %v758
        %v763 = vadd.f32 %v465, %v759
        %v764 = vmul.f32 %v752, %v597
        %v765 = vmul.f32 %v753, %v598
        %v766 = vmul.f32 %v754, %v599
        %v767 = vmul.f32 %v755, %v600
        %v768 = vadd.f32 %v551, %v764
        %v769 = vadd.f32 %v554, %v765
        %v770 = vadd.f32 %v559, %v766
        %v771 = vadd.f32 %v562, %v767
        %s772 = scalar_lea.vmem %s3, 16
        %v773 = vld [vmem:[%s772] sm:$0xf]
        %v774 = vld [vmem:[%s772 + $0x4] sm:$0xf]
        %v775 = vld [vmem:[%s772 + $0x8] sm:$0xf]
        %v776 = vld [vmem:[%s772 + $0xc] sm:$0xf]
        %s777 = scalar_lea.vmem %s4, 32
        %v778 = vld [vmem:[%s777] sm:$0xff]
        %v779 = vld [vmem:[%s777 + $0x8] sm:$0xff]
        %v780 = vld [vmem:[%s777 + $0x10] sm:$0xff]
        %v781 = vld [vmem:[%s777 + $0x18] sm:$0xff]
        %v782 = vpack.c.bf16 %v761, %v760
        %v783 = vpack.c.bf16 %v763, %v762
        %785 = vset.pattern.permute.xlu0 0
        %786 = vperm.xlu0 %785, %v778
        %v787 = vpop.permute.xlu0 %786
        %790 = vset.pattern.permute.xlu0 0
        %791 = vperm.xlu0 %790, %v779
        %v792 = vpop.permute.xlu0 %791
        %795 = vset.pattern.permute.xlu0 0
        %796 = vperm.xlu0 %795, %v780
        %v797 = vpop.permute.xlu0 %796
        %800 = vset.pattern.permute.xlu0 0
        %801 = vperm.xlu0 %800, %v781
        %v802 = vpop.permute.xlu0 %801
        %v808 = vunpack.c.l.b16 %v773
        %v809 = vunpack.c.l.b16 %v774
        %v810 = vunpack.c.l.b16 %v775
        %v811 = vunpack.c.l.b16 %v776
        %v812 = vpack.c.b16 %v809, %v808
        %v813 = vpack.c.b16 %v811, %v810
        %v815 = vsel %vm641, %v812, 0
        %v818 = vsel %vm641, %v813, 0
        %820 = vmatprep.subr.bf16.mxu0 0
        %821 = vmatpush1.bf16.msra.mxu0 %v782
        %822 = vmatprep.subr.bf16.mxu0 0
        %823 = vmatpush1.bf16.msra.mxu0 %v783
        %824 = vmatprep.subr.bf16.mxu0 0
        %825 = vmatpush1.bf16.msra.mxu0 0
        %826 = vmatprep.subr.bf16.mxu0 0
        %827 = vmatpush1.bf16.msra.mxu0 0
        %828 = vmatprep.subr.bf16.mxu0 0
        %829 = vmatpush1.bf16.msra.mxu0 0
        %830 = vmatprep.subr.bf16.mxu0 0
        %831 = vmatpush1.bf16.msra.mxu0 0
        %832 = vmatprep.subr.bf16.mxu0 0
        %833 = vmatpush1.bf16.msra.mxu0 0
        %834 = vmatprep.subr.bf16.mxu0 0
        %835 = vmatpush1.bf16.msra.mxu0 0
        %836 = vmatprep.subr.bf16.mxu0 0
        %837 = vmatpush1.bf16.msra.mxu0 0
        %838 = vmatprep.subr.bf16.mxu0 0
        %839 = vmatpush1.bf16.msra.mxu0 0
        %840 = vmatprep.subr.bf16.mxu0 0
        %841 = vmatpush1.bf16.msra.mxu0 0
        %842 = vmatprep.subr.bf16.mxu0 0
        %843 = vmatpush1.bf16.msra.mxu0 0
        %844 = vmatprep.subr.bf16.mxu0 0
        %845 = vmatpush1.bf16.msra.mxu0 0
        %846 = vmatprep.subr.bf16.mxu0 0
        %847 = vmatpush1.bf16.msra.mxu0 0
        %848 = vmatprep.subr.bf16.mxu0 0
        %849 = vmatpush1.bf16.msra.mxu0 0
        %850 = vmatprep.subr.bf16.mxu0 0
        %851 = vmatpush1.bf16.msra.mxu0 0
        %852 = vmatprep.mubr.bf16.mxu0 0
        %853 = vmatmul.mubr.bf16.gmra.mrb[0].mxu0 %v815
        %v854 = vpop.f32.mrb[0].mxu0
        %v855 = vadd.f32 %v787, %v854
        %v856 = vpop.f32.mrb[0].mxu0
        %v857 = vpop.f32.mrb[0].mxu0
        %v858 = vadd.f32 %v792, %v857
        %v859 = vpop.f32.mrb[0].mxu0
        %860 = vmatprep.mubr.bf16.mxu0 0
        %861 = vmatmul.mubr.bf16.gmra.mrb[0].mxu0 %v818
        %v862 = vpop.f32.mrb[0].mxu0
        %v863 = vadd.f32 %v797, %v862
        %v864 = vpop.f32.mrb[0].mxu0
        %v865 = vpop.f32.mrb[0].mxu0
        %v866 = vadd.f32 %v802, %v865
        %v867 = vpop.f32.mrb[0].mxu0
        %868 = vdwg.mxu0
        %v869 = vpack.c.bf16 %v769, %v768
        %v870 = vpack.c.bf16 %v771, %v770
        %871 = vmatprep.subr.bf16.mxu0 0
        %872 = vmatpush1.bf16.msra.mxu0 %v869
        %873 = vmatprep.subr.bf16.mxu0 0
        %874 = vmatpush1.bf16.msra.mxu0 %v870
        %875 = vmatprep.subr.bf16.mxu0 0
        %876 = vmatpush1.bf16.msra.mxu0 0
        %877 = vmatprep.subr.bf16.mxu0 0
        %878 = vmatpush1.bf16.msra.mxu0 0
        %879 = vmatprep.subr.bf16.mxu0 0
        %880 = vmatpush1.bf16.msra.mxu0 0
        %881 = vmatprep.subr.bf16.mxu0 0
        %882 = vmatpush1.bf16.msra.mxu0 0
        %883 = vmatprep.subr.bf16.mxu0 0
        %884 = vmatpush1.bf16.msra.mxu0 0
        %885 = vmatprep.subr.bf16.mxu0 0
        %886 = vmatpush1.bf16.msra.mxu0 0
        %887 = vmatprep.subr.bf16.mxu0 0
        %888 = vmatpush1.bf16.msra.mxu0 0
        %889 = vmatprep.subr.bf16.mxu0 0
        %890 = vmatpush1.bf16.msra.mxu0 0
        %891 = vmatprep.subr.bf16.mxu0 0
        %892 = vmatpush1.bf16.msra.mxu0 0
        %893 = vmatprep.subr.bf16.mxu0 0
        %894 = vmatpush1.bf16.msra.mxu0 0
        %895 = vmatprep.subr.bf16.mxu0 0
        %896 = vmatpush1.bf16.msra.mxu0 0
        %897 = vmatprep.subr.bf16.mxu0 0
        %898 = vmatpush1.bf16.msra.mxu0 0
        %899 = vmatprep.subr.bf16.mxu0 0
        %900 = vmatpush1.bf16.msra.mxu0 0
        %901 = vmatprep.subr.bf16.mxu0 0
        %902 = vmatpush1.bf16.msra.mxu0 0
        %903 = vmatprep.mubr.bf16.mxu0 0
        %904 = vmatmul.mubr.bf16.gmra.mrb[0].mxu0 %v815
        %v905 = vpop.f32.mrb[0].mxu0
        %v906 = vadd.f32 %v787, %v905
        %v907 = vpop.f32.mrb[0].mxu0
        %v908 = vpop.f32.mrb[0].mxu0
        %v909 = vadd.f32 %v792, %v908
        %v910 = vpop.f32.mrb[0].mxu0
        %911 = vmatprep.mubr.bf16.mxu0 0
        %912 = vmatmul.mubr.bf16.gmra.mrb[0].mxu0 %v818
        %v913 = vpop.f32.mrb[0].mxu0
        %v914 = vadd.f32 %v797, %v913
        %v915 = vpop.f32.mrb[0].mxu0
        %v916 = vpop.f32.mrb[0].mxu0
        %v917 = vadd.f32 %v802, %v916
        %v918 = vpop.f32.mrb[0].mxu0
        %919 = vdwg.mxu0
        %v920 = vtanh.pop %v855
        %v921 = vtanh.pop %v858
        %v922 = vtanh.pop %v863
        %v923 = vtanh.pop %v866
        %v924 = vtanh.pop %v906
        %v925 = vtanh.pop %v909
        %v926 = vtanh.pop %v914
        %v927 = vtanh.pop %v917
        %v928 = vmul.f32 %v920, %v500
        %v929 = vmul.f32 %v921, %v501
        %v930 = vmul.f32 %v922, %v502
        %v931 = vmul.f32 %v923, %v503
        %v932 = vadd.f32 %v454, %v928
        %v933 = vadd.f32 %v457, %v929
        %v934 = vadd.f32 %v462, %v930
        %v935 = vadd.f32 %v465, %v931
        %v936 = vmul.f32 %v924, %v597
        %v937 = vmul.f32 %v925, %v598
        %v938 = vmul.f32 %v926, %v599
        %v939 = vmul.f32 %v927, %v600
        %v940 = vadd.f32 %v551, %v936
        %v941 = vadd.f32 %v554, %v937
        %v942 = vadd.f32 %v559, %v938
        %v943 = vadd.f32 %v562, %v939
        %s944 = scalar_lea.vmem %s3, 32
        %v945 = vld [vmem:[%s944] sm:$0xf]
        %v946 = vld [vmem:[%s944 + $0x4] sm:$0xf]
        %v947 = vld [vmem:[%s944 + $0x8] sm:$0xf]
        %v948 = vld [vmem:[%s944 + $0xc] sm:$0xf]
        %s949 = scalar_lea.vmem %s4, 64
        %v950 = vld [vmem:[%s949] sm:$0xff]
        %v951 = vld [vmem:[%s949 + $0x8] sm:$0xff]
        %v952 = vld [vmem:[%s949 + $0x10] sm:$0xff]
        %v953 = vld [vmem:[%s949 + $0x18] sm:$0xff]
        %v954 = vpack.c.bf16 %v933, %v932
        %v955 = vpack.c.bf16 %v935, %v934
        %957 = vset.pattern.permute.xlu0 0
        %958 = vperm.xlu0 %957, %v950
        %v959 = vpop.permute.xlu0 %958
        %962 = vset.pattern.permute.xlu0 0
        %963 = vperm.xlu0 %962, %v951
        %v964 = vpop.permute.xlu0 %963
        %967 = vset.pattern.permute.xlu0 0
        %968 = vperm.xlu0 %967, %v952
        %v969 = vpop.permute.xlu0 %968
        %972 = vset.pattern.permute.xlu0 0
        %973 = vperm.xlu0 %972, %v953
        %v974 = vpop.permute.xlu0 %973
        %v980 = vunpack.c.l.b16 %v945
        %v981 = vunpack.c.l.b16 %v946
        %v982 = vunpack.c.l.b16 %v947
        %v983 = vunpack.c.l.b16 %v948
        %v984 = vpack.c.b16 %v981, %v980
        %v985 = vpack.c.b16 %v983, %v982
        %v987 = vsel %vm641, %v984, 0
        %v990 = vsel %vm641, %v985, 0
        %992 = vmatprep.subr.bf16.mxu0 0
        %993 = vmatpush1.bf16.msra.mxu0 %v954
        %994 = vmatprep.subr.bf16.mxu0 0
        %995 = vmatpush1.bf16.msra.mxu0 %v955
        %996 = vmatprep.subr.bf16.mxu0 0
        %997 = vmatpush1.bf16.msra.mxu0 0
        %998 = vmatprep.subr.bf16.mxu0 0
        %999 = vmatpush1.bf16.msra.mxu0 0
        %1000 = vmatprep.subr.bf16.mxu0 0
        %1001 = vmatpush1.bf16.msra.mxu0 0
        %1002 = vmatprep.subr.bf16.mxu0 0
        %1003 = vmatpush1.bf16.msra.mxu0 0
        %1004 = vmatprep.subr.bf16.mxu0 0
        %1005 = vmatpush1.bf16.msra.mxu0 0
        %1006 = vmatprep.subr.bf16.mxu0 0
        %1007 = vmatpush1.bf16.msra.mxu0 0
        %1008 = vmatprep.subr.bf16.mxu0 0
        %1009 = vmatpush1.bf16.msra.mxu0 0
        %1010 = vmatprep.subr.bf16.mxu0 0
        %1011 = vmatpush1.bf16.msra.mxu0 0
        %1012 = vmatprep.subr.bf16.mxu0 0
        %1013 = vmatpush1.bf16.msra.mxu0 0
        %1014 = vmatprep.subr.bf16.mxu0 0
        %1015 = vmatpush1.bf16.msra.mxu0 0
        %1016 = vmatprep.subr.bf16.mxu0 0
        %1017 = vmatpush1.bf16.msra.mxu0 0
        %1018 = vmatprep.subr.bf16.mxu0 0
        %1019 = vmatpush1.bf16.msra.mxu0 0
        %1020 = vmatprep.subr.bf16.mxu0 0
        %1021 = vmatpush1.bf16.msra.mxu0 0
        %1022 = vmatprep.subr.bf16.mxu0 0
        %1023 = vmatpush1.bf16.msra.mxu0 0
        %1024 = vmatprep.mubr.bf16.mxu0 0
        %1025 = vmatmul.mubr.bf16.gmra.mrb[0].mxu0 %v987
        %v1026 = vpop.f32.mrb[0].mxu0
        %v1027 = vadd.f32 %v959, %v1026
        %v1028 = vpop.f32.mrb[0].mxu0
        %v1029 = vpop.f32.mrb[0].mxu0
        %v1030 = vadd.f32 %v964, %v1029
        %v1031 = vpop.f32.mrb[0].mxu0
        %1032 = vmatprep.mubr.bf16.mxu0 0
        %1033 = vmatmul.mubr.bf16.gmra.mrb[0].mxu0 %v990
        %v1034 = vpop.f32.mrb[0].mxu0
        %v1035 = vadd.f32 %v969, %v1034
        %v1036 = vpop.f32.mrb[0].mxu0
        %v1037 = vpop.f32.mrb[0].mxu0
        %v1038 = vadd.f32 %v974, %v1037
        %v1039 = vpop.f32.mrb[0].mxu0
        %1040 = vdwg.mxu0
        %v1041 = vpack.c.bf16 %v941, %v940
        %v1042 = vpack.c.bf16 %v943, %v942
        %1043 = vmatprep.subr.bf16.mxu0 0
        %1044 = vmatpush1.bf16.msra.mxu0 %v1041
        %1045 = vmatprep.subr.bf16.mxu0 0
        %1046 = vmatpush1.bf16.msra.mxu0 %v1042
        %1047 = vmatprep.subr.bf16.mxu0 0
        %1048 = vmatpush1.bf16.msra.mxu0 0
        %1049 = vmatprep.subr.bf16.mxu0 0
        %1050 = vmatpush1.bf16.msra.mxu0 0
        %1051 = vmatprep.subr.bf16.mxu0 0
        %1052 = vmatpush1.bf16.msra.mxu0 0
        %1053 = vmatprep.subr.bf16.mxu0 0
        %1054 = vmatpush1.bf16.msra.mxu0 0
        %1055 = vmatprep.subr.bf16.mxu0 0
        %1056 = vmatpush1.bf16.msra.mxu0 0
        %1057 = vmatprep.subr.bf16.mxu0 0
        %1058 = vmatpush1.bf16.msra.mxu0 0
        %1059 = vmatprep.subr.bf16.mxu0 0
        %1060 = vmatpush1.bf16.msra.mxu0 0
        %1061 = vmatprep.subr.bf16.mxu0 0
        %1062 = vmatpush1.bf16.msra.mxu0 0
        %1063 = vmatprep.subr.bf16.mxu0 0
        %1064 = vmatpush1.bf16.msra.mxu0 0
        %1065 = vmatprep.subr.bf16.mxu0 0
        %1066 = vmatpush1.bf16.msra.mxu0 0
        %1067 = vmatprep.subr.bf16.mxu0 0
        %1068 = vmatpush1.bf16.msra.mxu0 0
        %1069 = vmatprep.subr.bf16.mxu0 0
        %1070 = vmatpush1.bf16.msra.mxu0 0
        %1071 = vmatprep.subr.bf16.mxu0 0
        %1072 = vmatpush1.bf16.msra.mxu0 0
        %1073 = vmatprep.subr.bf16.mxu0 0
        %1074 = vmatpush1.bf16.msra.mxu0 0
        %1075 = vmatprep.mubr.bf16.mxu0 0
        %1076 = vmatmul.mubr.bf16.gmra.mrb[0].mxu0 %v987
        %v1077 = vpop.f32.mrb[0].mxu0
        %v1078 = vadd.f32 %v959, %v1077
        %v1079 = vpop.f32.mrb[0].mxu0
        %v1080 = vpop.f32.mrb[0].mxu0
        %v1081 = vadd.f32 %v964, %v1080
        %v1082 = vpop.f32.mrb[0].mxu0
        %1083 = vmatprep.mubr.bf16.mxu0 0
        %1084 = vmatmul.mubr.bf16.gmra.mrb[0].mxu0 %v990
        %v1085 = vpop.f32.mrb[0].mxu0
        %v1086 = vadd.f32 %v969, %v1085
        %v1087 = vpop.f32.mrb[0].mxu0
        %v1088 = vpop.f32.mrb[0].mxu0
        %v1089 = vadd.f32 %v974, %v1088
        %v1090 = vpop.f32.mrb[0].mxu0
        %1091 = vdwg.mxu0
        %v1092 = vtanh.pop %v1027
        %v1093 = vtanh.pop %v1030
        %v1094 = vtanh.pop %v1035
        %v1095 = vtanh.pop %v1038
        %v1096 = vtanh.pop %v1078
        %v1097 = vtanh.pop %v1081
        %v1098 = vtanh.pop %v1086
        %v1099 = vtanh.pop %v1089
        %v1100 = vmul.f32 %v1092, %v500
        %v1101 = vmul.f32 %v1093, %v501
        %v1102 = vmul.f32 %v1094, %v502
        %v1103 = vmul.f32 %v1095, %v503
        %v1104 = vadd.f32 %v454, %v1100
        %v1105 = vadd.f32 %v457, %v1101
        %v1106 = vadd.f32 %v462, %v1102
        %v1107 = vadd.f32 %v465, %v1103
        %v1108 = vmul.f32 %v1096, %v597
        %v1109 = vmul.f32 %v1097, %v598
        %v1110 = vmul.f32 %v1098, %v599
        %v1111 = vmul.f32 %v1099, %v600
        %v1112 = vadd.f32 %v551, %v1108
        %v1113 = vadd.f32 %v554, %v1109
        %v1114 = vadd.f32 %v559, %v1110
        %v1115 = vadd.f32 %v562, %v1111
        %v1116 = vld [vmem:[%s5] sm:$0xf]
        %v1117 = vld [vmem:[%s6] sm:$0xff]
        %v1118 = vpack.c.bf16 %v1105, %v1104
        %v1119 = vpack.c.bf16 %v1107, %v1106
        %1121 = vset.pattern.permute.xlu0 0
        %1122 = vperm.xlu0 %1121, %v1117
        %v1123 = vpop.permute.xlu0 %1122
        %v1126 = vsel %vm641, %v1116, 0
        %1128 = vmatprep.subr.bf16.mxu0 0
        %1129 = vmatpush1.bf16.msra.mxu0 %v1118
        %1130 = vmatprep.subr.bf16.mxu0 0
        %1131 = vmatpush1.bf16.msra.mxu0 %v1119
        %1132 = vmatprep.subr.bf16.mxu0 0
        %1133 = vmatpush1.bf16.msra.mxu0 0
        %1134 = vmatprep.subr.bf16.mxu0 0
        %1135 = vmatpush1.bf16.msra.mxu0 0
        %1136 = vmatprep.subr.bf16.mxu0 0
        %1137 = vmatpush1.bf16.msra.mxu0 0
        %1138 = vmatprep.subr.bf16.mxu0 0
        %1139 = vmatpush1.bf16.msra.mxu0 0
        %1140 = vmatprep.subr.bf16.mxu0 0
        %1141 = vmatpush1.bf16.msra.mxu0 0
        %1142 = vmatprep.subr.bf16.mxu0 0
        %1143 = vmatpush1.bf16.msra.mxu0 0
        %1144 = vmatprep.subr.bf16.mxu0 0
        %1145 = vmatpush1.bf16.msra.mxu0 0
        %1146 = vmatprep.subr.bf16.mxu0 0
        %1147 = vmatpush1.bf16.msra.mxu0 0
        %1148 = vmatprep.subr.bf16.mxu0 0
        %1149 = vmatpush1.bf16.msra.mxu0 0
        %1150 = vmatprep.subr.bf16.mxu0 0
        %1151 = vmatpush1.bf16.msra.mxu0 0
        %1152 = vmatprep.subr.bf16.mxu0 0
        %1153 = vmatpush1.bf16.msra.mxu0 0
        %1154 = vmatprep.subr.bf16.mxu0 0
        %1155 = vmatpush1.bf16.msra.mxu0 0
        %1156 = vmatprep.subr.bf16.mxu0 0
        %1157 = vmatpush1.bf16.msra.mxu0 0
        %1158 = vmatprep.subr.bf16.mxu0 0
        %1159 = vmatpush1.bf16.msra.mxu0 0
        %1160 = vmatprep.mubr.bf16.mxu0 0
        %1161 = vmatmul.mubr.bf16.gmra.mrb[0].mxu0 %v1126
        %v1162 = vpop.f32.mrb[0].mxu0
        %v1163 = vadd.f32 %v1123, %v1162
        %v1164 = vpop.f32.mrb[0].mxu0
        %v1165 = vpop.f32.mrb[0].mxu0
        %v1166 = vpop.f32.mrb[0].mxu0
        %1167 = vdwg.mxu0
        %1168 = vst [vmem:[%s272] sm:$0xff] %v1163
        %v1169 = vpack.c.bf16 %v1113, %v1112
        %v1170 = vpack.c.bf16 %v1115, %v1114
        %1171 = vmatprep.subr.bf16.mxu0 0
        %1172 = vmatpush1.bf16.msra.mxu0 %v1169
        %1173 = vmatprep.subr.bf16.mxu0 0
        %1174 = vmatpush1.bf16.msra.mxu0 %v1170
        %1175 = vmatprep.subr.bf16.mxu0 0
        %1176 = vmatpush1.bf16.msra.mxu0 0
        %1177 = vmatprep.subr.bf16.mxu0 0
        %1178 = vmatpush1.bf16.msra.mxu0 0
        %1179 = vmatprep.subr.bf16.mxu0 0
        %1180 = vmatpush1.bf16.msra.mxu0 0
        %1181 = vmatprep.subr.bf16.mxu0 0
        %1182 = vmatpush1.bf16.msra.mxu0 0
        %1183 = vmatprep.subr.bf16.mxu0 0
        %1184 = vmatpush1.bf16.msra.mxu0 0
        %1185 = vmatprep.subr.bf16.mxu0 0
        %1186 = vmatpush1.bf16.msra.mxu0 0
        %1187 = vmatprep.subr.bf16.mxu0 0
        %1188 = vmatpush1.bf16.msra.mxu0 0
        %1189 = vmatprep.subr.bf16.mxu0 0
        %1190 = vmatpush1.bf16.msra.mxu0 0
        %1191 = vmatprep.subr.bf16.mxu0 0
        %1192 = vmatpush1.bf16.msra.mxu0 0
        %1193 = vmatprep.subr.bf16.mxu0 0
        %1194 = vmatpush1.bf16.msra.mxu0 0
        %1195 = vmatprep.subr.bf16.mxu0 0
        %1196 = vmatpush1.bf16.msra.mxu0 0
        %1197 = vmatprep.subr.bf16.mxu0 0
        %1198 = vmatpush1.bf16.msra.mxu0 0
        %1199 = vmatprep.subr.bf16.mxu0 0
        %1200 = vmatpush1.bf16.msra.mxu0 0
        %1201 = vmatprep.subr.bf16.mxu0 0
        %1202 = vmatpush1.bf16.msra.mxu0 0
        %1203 = vmatprep.mubr.bf16.mxu0 0
        %1204 = vmatmul.mubr.bf16.gmra.mrb[0].mxu0 %v1126
        %v1205 = vpop.f32.mrb[0].mxu0
        %v1206 = vadd.f32 %v1123, %v1205
        %v1207 = vpop.f32.mrb[0].mxu0
        %v1208 = vpop.f32.mrb[0].mxu0
        %v1209 = vpop.f32.mrb[0].mxu0
        %1210 = vdwg.mxu0
        %1211 = vst [vmem:[%s272 + $0x8] sm:$0xff] %v1206
        %s1212 = sand.u32 %s181, 1
        %s1213 = scalar_lea.sflag [#allocation3], %s1212
        %s1214 = sand.u32 %s181, 1
        %s1215 = smul.addr %s1214, 16
        %s1216 = scalar_lea.vmem [#allocation2], %s1215
        // Predicated region
        $region49: #{tpu_custom_call.1} parent=47 // pred_check
          %p1217 = pneg %p191
        $region50: #{tpu_custom_call.1} parent=47 // pred_check_branch
          %1219 = sbr.rel (%p1217) target = $region52
        $region51: #{tpu_custom_call.1} parent=47 // pred_region
          %s1220 = smul.u32 2, %s21
          %s1222 = ssub.s32 256, 256
          %1223 = vsyncadd %s1213, %s1222
          %s1224 = smul.addr %s1220, 128
          %s1225 = scalar_lea.hbm %s7, %s1224
          %s1227 = sshll.u32 %s1216, 4
          %s1228 = int_to_ptr.vmem [resolvable:$true] %s1227
          %1230 = dma.vmem_to_hbm [thread:$0]  %s1228, 256, %s1225, %s1213
        $region52: #{tpu_custom_call.1} parent=47 // pred_fallthru
          _
      $region48: #{tpu_custom_call.1} parent=5 // pred_fallthru
        _
      %p1231 = scmp.le.s32.totalorder 2, %s16
      // Predicated region
      $region53: #{tpu_custom_call.1} parent=5 // pred_check
        %p1232 = pneg %p1231
      $region54: #{tpu_custom_call.1} parent=5 // pred_check_branch
        %1234 = sbr.rel (%p1232) target = $region56
      $region55: #{tpu_custom_call.1} parent=5 // pred_region
        %s1235 = ssub.s32 %s16, 2
        // Predicated region
        $region57: #{tpu_custom_call.1} parent=55 // pred_check
          %p1236 = pneg %p197
        $region58: #{tpu_custom_call.1} parent=55 // pred_check_branch
          %1238 = sbr.rel (%p1236) target = $region60
        $region59: #{tpu_custom_call.1} parent=55 // pred_region
          %s1239 = sand.u32 %s182, 1
          %s1240 = scalar_lea.sflag [#allocation3], %s1239
          %s1241 = sand.u32 %s182, 1
          %s1242 = smul.addr %s1241, 16
          %s1243 = scalar_lea.vmem [#allocation2], %s1242
          %1244 = dma.done %s1240, 256
        $region60: #{tpu_custom_call.1} parent=55 // pred_fallthru
          _
      $region56: #{tpu_custom_call.1} parent=5 // pred_fallthru
        _
    $region6: #{tpu_custom_call.1} parent=1 // loop_footer
      %s20 = sadd.s32 1, %s16
    $region7: #{tpu_custom_call.1} parent=1 // loop_footer_branch
      %15 = sbr.rel target = $region3
    $region8: #{tpu_custom_call.1} parent=1 // loop_exit
      _
    %1245 = vsyncpa [#allocation3], 1
    %s1246 = scalar_lea.sflag [#allocation3], 1
    %1247 = vsyncpa %s1246, 1

</llo_original>
